<compile_context>
chip_gen: v7x
topology: tpu7x:2x2x1
jax: 0.10.0
libtpu: 0.0.40
codegen_flags: <defaults>
</compile_context>

<pallas_src>
import functools

import jax
import jax.numpy as jnp
from jax.experimental import pallas as pl
from jax.experimental.pallas import tpu as pltpu


def _round_up(x, m):
    return (x + m - 1) // m * m


def _patch_embed_kernel(p_ref, w_ref, b_ref, o_ref):
    # p_ref: (TM, K)   patch tile       (compute dtype, e.g. bf16)
    # w_ref: (K, Npad) projection       (resident across all grid steps)
    # b_ref: (1, Npad) bias             (f32, resident)
    # o_ref: (TM, Npad) output tile
    acc = jnp.dot(p_ref[...], w_ref[...], preferred_element_type=jnp.float32)
    o_ref[...] = (acc + b_ref[...].astype(jnp.float32)).astype(o_ref.dtype)


@functools.partial(jax.jit, static_argnames=("patch_size", "stride", "compute_dtype"))
def patch_embed_forward(x, weight, bias, *, patch_size, stride,
                        compute_dtype=jnp.bfloat16):
    """PatchEmbed forward: Conv2d(kernel=stride=patch_size) + flatten(2).transpose(1,2).

    x: (B, C, H, W); weight: (E, C, ph, pw); bias: (E,).
    Returns (B, num_patches, E) in x.dtype.
    """
    B, C, H, W = x.shape
    E, Cw, ph, pw = weight.shape
    assert C == Cw and ph == patch_size and pw == patch_size
    assert stride == patch_size, "non-overlapping patches only (stride == patch_size)"
    gh = (H - ph) // stride + 1
    gw = (W - pw) // stride + 1
    num_patches = gh * gw

    # ---- patch extraction (im2col for non-overlapping patches) --------------
    # Flatten order (C, ph, pw) matches weight.reshape(E, C*ph*pw).
    # TODO(synk): fold this transpose into the kernel's input DMA (grid over
    # (B, gh) reading x directly) to fully avoid the HBM round-trip; for now the
    # allow_input_fusion hint lets XLA fuse it into the pallas_call operand.
    patches = x.reshape(B, C, gh, ph, gw, pw)
    patches = jnp.transpose(patches, (0, 2, 4, 1, 3, 5))
    patches = patches.reshape(B * num_patches, C * ph * pw)

    M, K = patches.shape
    N = E

    # ---- tiling / padding ----------------------------------------------------
    n_pad = _round_up(N, 128)                 # lane-dense output stores
    tm = min(512, _round_up(M, 256))          # 256-multiple: MXU-friendly on v5e/v6e/v7x
    m_pad = _round_up(M, tm)                  # grid divides evenly; tail rows are zeros
    grid_m = m_pad // tm

    patches = patches.astype(compute_dtype)
    w_flat = weight.reshape(E, K).T.astype(compute_dtype)   # (K, N)
    b_flat = bias.astype(jnp.float32).reshape(1, N)         # bias add stays f32

    if m_pad != M:
        patches = jnp.pad(patches, ((0, m_pad - M), (0, 0)))
    if n_pad != N:
        w_flat = jnp.pad(w_flat, ((0, 0), (0, n_pad - N)))
        b_flat = jnp.pad(b_flat, ((0, 0), (0, n_pad - N)))

    cbytes = jnp.dtype(compute_dtype).itemsize
    obytes = jnp.dtype(x.dtype).itemsize
    # double-buffered patch tile + resident weight/bias + double-buffered output tile
    vmem_est = (2 * tm * K * cbytes + K * n_pad * cbytes + 2 * n_pad * 4
                + 2 * tm * n_pad * obytes)
    vmem_limit = int(min(64 * 1024 * 1024, max(2 * vmem_est, 16 * 1024 * 1024)))

    cost = pl.CostEstimate(
        flops=2 * m_pad * K * n_pad,
        transcendentals=0,
        bytes_accessed=(m_pad * K * cbytes + K * n_pad * cbytes
                        + m_pad * n_pad * obytes),
    )

    out = pl.pallas_call(
        _patch_embed_kernel,
        out_shape=jax.ShapeDtypeStruct((m_pad, n_pad), x.dtype),
        grid_spec=pltpu.PrefetchScalarGridSpec(
            num_scalar_prefetch=0,
            grid=(grid_m,),
            in_specs=[
                pl.BlockSpec((tm, K), lambda i: (i, 0)),      # patches: tiled over M
                pl.BlockSpec((K, n_pad), lambda i: (0, 0)),   # weight: resident in VMEM
                pl.BlockSpec((1, n_pad), lambda i: (0, 0)),   # bias:   resident in VMEM
            ],
            out_specs=pl.BlockSpec((tm, n_pad), lambda i: (i, 0)),
        ),
        compiler_params=pltpu.CompilerParams(
            dimension_semantics=("parallel",),        # shard M tiles across TCs (v7x)
            vmem_limit_bytes=vmem_limit,
            allow_input_fusion=[True, False, False],  # let XLA fuse patch transpose
        ),
        cost_estimate=cost,
    )(patches, w_flat, b_flat)

    out = out[:M, :N]
    return out.reshape(B, num_patches, E)


if __name__ == "__main__":
    # Small shapes consistent with the module: img_size=16, patch_size=stride=4,
    # in_chans=4, embed_dim=32, batch=2 -> grid_size=(4,4), num_patches=16.
    B, C, H, W = 2, 4, 16, 16
    patch_size = stride = 4
    embed_dim = 32

    key = jax.random.PRNGKey(0)
    kx, kw, kb = jax.random.split(key, 3)
    x = jax.random.normal(kx, (B, C, H, W), dtype=jnp.float32)
    weight = 0.02 * jax.random.normal(
        kw, (embed_dim, C, patch_size, patch_size), dtype=jnp.float32)
    bias = 0.01 * jax.random.normal(kb, (embed_dim,), dtype=jnp.float32)

    # Reference: lax conv == nn.Conv2d forward, then flatten(2).transpose(1, 2).
    ref = jax.lax.conv_general_dilated(
        x, weight, window_strides=(stride, stride), padding="VALID",
        dimension_numbers=("NCHW", "OIHW", "NCHW"))
    ref = ref + bias.reshape(1, embed_dim, 1, 1)
    gh = (H - patch_size) // stride + 1
    gw = (W - patch_size) // stride + 1
    num_patches = gh * gw
    ref = ref.reshape(B, embed_dim, num_patches).transpose(0, 2, 1)

    # f32 compute path: strict numerical check of the kernel structure.
    out_f32 = patch_embed_forward(x, weight, bias, patch_size=patch_size,
                                  stride=stride, compute_dtype=jnp.float32)
    out_f32 = jax.block_until_ready(out_f32)
    assert out_f32.shape == (B, num_patches, embed_dim), out_f32.shape
    assert jnp.allclose(out_f32, ref, atol=1e-4, rtol=1e-4), "f32 mismatch vs conv ref"

    # bf16 MXU path (default / perf path): tolerance covers bf16 input rounding.
    out_bf16 = patch_embed_forward(x, weight, bias, patch_size=patch_size,
                                   stride=stride, compute_dtype=jnp.bfloat16)
    out_bf16 = jax.block_until_ready(out_bf16)
    assert out_bf16.shape == (B, num_patches, embed_dim), out_bf16.shape
    assert jnp.allclose(out_bf16, ref, atol=2e-2, rtol=2e-2), "bf16 mismatch vs conv ref"

    print("KERNEL_OK")
</pallas_src>

<mosaic_0001>
module attributes {stable_mosaic.version = 11 : i64} {
  func.func @_patch_embed_kernel(%arg0: i32, %arg1: memref<256x64xf32, #tpu.memory_space<vmem>>, %arg2: memref<64x128xf32, #tpu.memory_space<vmem>>, %arg3: memref<1x128xf32, #tpu.memory_space<vmem>>, %arg4: memref<256x128xf32, #tpu.memory_space<vmem>>) attributes {dimension_semantics = [#tpu.dimension_semantics<parallel>], iteration_bounds = array<i64: 1>, scalar_prefetch = 0 : i64, scratch_operands = 0 : i64, tpu.core_type = #tpu.core_type<tc>, window_params = [{transform_indices = @transform_0, window_bounds = array<i64: 256, 64>}, {pipeline_mode = #tpu.pipeline_mode<synchronous>, transform_indices = @transform_1, window_bounds = array<i64: 64, 128>}, {pipeline_mode = #tpu.pipeline_mode<synchronous>, transform_indices = @transform_2, window_bounds = array<i64: 1, 128>}, {transform_indices = @transform_3, window_bounds = array<i64: 256, 128>}]} {
    %c0 = arith.constant 0 : index
    %c0_0 = arith.constant 0 : index
    %0 = vector.load %arg1[%c0, %c0_0] : memref<256x64xf32, #tpu.memory_space<vmem>>, vector<256x64xf32>
    %c0_1 = arith.constant 0 : index
    %c0_2 = arith.constant 0 : index
    %1 = vector.load %arg2[%c0_1, %c0_2] : memref<64x128xf32, #tpu.memory_space<vmem>>, vector<64x128xf32>
    %cst = arith.constant dense<0.000000e+00> : vector<256x128xf32>
    %2 = tpu.matmul %0, %1, %cst {dimension_numbers = #tpu.dot_dimension_numbers<[1], [0], [0], [1], [0, 0, 1, 1], [], []>} : vector<256x64xf32>, vector<64x128xf32>, vector<256x128xf32> -> vector<256x128xf32>
    %c0_3 = arith.constant 0 : index
    %c0_4 = arith.constant 0 : index
    %3 = vector.load %arg3[%c0_3, %c0_4] : memref<1x128xf32, #tpu.memory_space<vmem>>, vector<1x128xf32>
    %4 = vector.broadcast %3 : vector<1x128xf32> to vector<256x128xf32>
    %5 = arith.addf %2, %4 : vector<256x128xf32>
    %c0_5 = arith.constant 0 : index
    %c0_6 = arith.constant 0 : index
    %6 = vector.load %arg4[%c0_5, %c0_6] : memref<256x128xf32, #tpu.memory_space<vmem>>, vector<256x128xf32>
    tpu.vector_store %arg4[%c0_5, %c0_6], %5 {strides = array<i32>} : memref<256x128xf32, #tpu.memory_space<vmem>>, vector<256x128xf32>,
    return
  }
  func.func @transform_0(%arg0: i32) -> (i32, i32) {
    %c0_i32 = arith.constant 0 : i32
    %c0_i32_0 = arith.constant 0 : i32
    return %arg0, %c0_i32 : i32, i32
  }
  func.func @transform_1(%arg0: i32) -> (i32, i32) {
    %c0_i32 = arith.constant 0 : i32
    %c0_i32_0 = arith.constant 0 : i32
    %c0_i32_1 = arith.constant 0 : i32
    return %c0_i32, %c0_i32_0 : i32, i32
  }
  func.func @transform_2(%arg0: i32) -> (i32, i32) {
    %c0_i32 = arith.constant 0 : i32
    %c0_i32_0 = arith.constant 0 : i32
    %c0_i32_1 = arith.constant 0 : i32
    return %c0_i32, %c0_i32_0 : i32, i32
  }
  func.func @transform_3(%arg0: i32) -> (i32, i32) {
    %c0_i32 = arith.constant 0 : i32
    %c0_i32_0 = arith.constant 0 : i32
    return %arg0, %c0_i32 : i32, i32
  }
}

</mosaic_0001>

<llo_original>
// kernel: patch_embed_forward.2
$region0: #{patch_embed_forward.2}
  #allocation0 [shape = 'u32[]', space=smem, size = 0x4, offset = 0x4, fixed_abs, tag = 'smem constant byte address 0x4 - core index']
  #allocation1 [shape = 'u32[144,128]{1,0:T(1,128)}', space=vmem, size = 0x12000, scoped, tag = 'internal scratch']
  #allocation2 [shape = 'u32[2048]{0}', space=vmem, size = 0x2000, scoped, tag = 'scoped memory for patch_embed_forward.2']
  #allocation3 [shape = 'u32[2048]{0}', space=vmem, size = 0x2000, scoped, tag = 'scoped memory for patch_embed_forward.2']
  #allocation4 [shape = 'u32[2048]{0}', space=vmem, size = 0x2000, scoped, tag = 'scoped memory for patch_embed_forward.2']
  #allocation5 [shape = 'u32[2048]{0}', space=vmem, size = 0x2000, scoped, tag = 'scoped memory for patch_embed_forward.2']
  #allocation6 [shape = 'u32[2048]{0}', space=vmem, size = 0x2000, scoped, tag = 'scoped memory for patch_embed_forward.2']
  %s0 = inlined_call_operand.vmem [shape: f32[64,128], index: 0, kind: input, shape index: {}]
  %s1 = inlined_call_operand.vmem [shape: f32[1,128], index: 1, kind: input, shape index: {}]
  %s2 = inlined_call_operand.vmem [shape: f32[32,64], index: 2, kind: input, shape index: {}]
  %s3 = inlined_call_operand.<no memory space> [shape: f32[], index: 3, kind: input, shape index: {}]
  %s4 = inlined_call_operand.vmem [shape: f32[256,128], index: 4, kind: output, shape index: {}]
  %s5 = sld [smem:[#allocation0]]
  $region22: #{patch_embed_forward.2} parent=0
    _
  %s7 = ssub.s32 1, %s5
  %s8 = scalar_select 0, %s7, %s5
  %v9 = vstv %s3
  $region1: #{patch_embed_forward.2} parent=0
    #allocation7 [shape = 'u8[131072]{0}', space=vmem, size = 0x20000, dematerialized = true, scoped, tag = 'FusionAdapter Buffer %fusion.1 = f32[256,64]{1,0:T(8,128)} fusion(%param_2.1, %param_3), kind=kLoop, calls=%fused_computation.2.clone, metadata={op_name="jit(patch_embed_forward)/jit(_pad)/pad" stack_frame_id=12}']
    // Predicated region
    $region2: #{patch_embed_forward.2} parent=1 // pred_check
      _
    $region3: #{patch_embed_forward.2} parent=1 // pred_check_branch
      %11 = sbr.rel (0) target = $region5
    $region4: #{patch_embed_forward.2} parent=1 // pred_region
      _
    $region5: #{patch_embed_forward.2} parent=1 // pred_fallthru
      _
    // Predicated region
    $region6: #{patch_embed_forward.2} parent=1 // pred_check
      _
    $region7: #{patch_embed_forward.2} parent=1 // pred_check_branch
      %13 = sbr.rel (0) target = $region9
    $region8: #{patch_embed_forward.2} parent=1 // pred_region
      _
    $region9: #{patch_embed_forward.2} parent=1 // pred_fallthru
      _
    // Predicated region
    $region10: #{patch_embed_forward.2} parent=1 // pred_check
      _
    $region11: #{patch_embed_forward.2} parent=1 // pred_check_branch
      %15 = sbr.rel (0) target = $region13
    $region12: #{patch_embed_forward.2} parent=1 // pred_region
      _
    $region13: #{patch_embed_forward.2} parent=1 // pred_fallthru
      _
    %v16 = vld [vmem:[%s2] sm:$0xff]
    %v17 = vlaneseq
    %v18 = vand.u32 %v17, 127
    %vm20 = vcmp.lt.s32.totalorder %v18, 64
    %v21 = vsel %vm20, %v16, %v9
    %23 = vst [vmem:[#allocation7] sm:$0xff] %v21
    %s24 = scalar_lea.vmem %s2, 8
    %v25 = vld [vmem:[%s24] sm:$0xff]
    %v26 = vlaneseq
    %v27 = vand.u32 %v26, 127
    %vm29 = vcmp.lt.s32.totalorder %v27, 64
    %v30 = vsel %vm29, %v25, %v9
    %s31 = scalar_lea.vmem [#allocation7], 8
    %33 = vst [vmem:[%s31] sm:$0xff] %v30
    %s34 = scalar_lea.vmem %s2, 16
    %v35 = vld [vmem:[%s34] sm:$0xff]
    %v36 = vlaneseq
    %v37 = vand.u32 %v36, 127
    %vm39 = vcmp.lt.s32.totalorder %v37, 64
    %v40 = vsel %vm39, %v35, %v9
    %s41 = scalar_lea.vmem [#allocation7], 16
    %43 = vst [vmem:[%s41] sm:$0xff] %v40
    %s44 = scalar_lea.vmem %s2, 24
    %v45 = vld [vmem:[%s44] sm:$0xff]
    %v46 = vlaneseq
    %v47 = vand.u32 %v46, 127
    %vm49 = vcmp.lt.s32.totalorder %v47, 64
    %v50 = vsel %vm49, %v45, %v9
    %s51 = scalar_lea.vmem [#allocation7], 24
    %53 = vst [vmem:[%s51] sm:$0xff] %v50
    %s54 = scalar_lea.vmem [#allocation7], 32
    %56 = vst [vmem:[%s54] sm:$0xff] %v9
    %s57 = scalar_lea.vmem [#allocation7], 40
    %59 = vst [vmem:[%s57] sm:$0xff] %v9
    %s60 = scalar_lea.vmem [#allocation7], 48
    %62 = vst [vmem:[%s60] sm:$0xff] %v9
    %s63 = scalar_lea.vmem [#allocation7], 56
    %65 = vst [vmem:[%s63] sm:$0xff] %v9
    %s66 = scalar_lea.vmem [#allocation7], 64
    %68 = vst [vmem:[%s66] sm:$0xff] %v9
    %s69 = scalar_lea.vmem [#allocation7], 72
    %71 = vst [vmem:[%s69] sm:$0xff] %v9
    %s72 = scalar_lea.vmem [#allocation7], 80
    %74 = vst [vmem:[%s72] sm:$0xff] %v9
    %s75 = scalar_lea.vmem [#allocation7], 88
    %77 = vst [vmem:[%s75] sm:$0xff] %v9
    %s78 = scalar_lea.vmem [#allocation7], 96
    %80 = vst [vmem:[%s78] sm:$0xff] %v9
    %s81 = scalar_lea.vmem [#allocation7], 104
    %83 = vst [vmem:[%s81] sm:$0xff] %v9
    %s84 = scalar_lea.vmem [#allocation7], 112
    %86 = vst [vmem:[%s84] sm:$0xff] %v9
    %s87 = scalar_lea.vmem [#allocation7], 120
    %89 = vst [vmem:[%s87] sm:$0xff] %v9
    %s90 = scalar_lea.vmem [#allocation7], 128
    %92 = vst [vmem:[%s90] sm:$0xff] %v9
    %s93 = scalar_lea.vmem [#allocation7], 136
    %95 = vst [vmem:[%s93] sm:$0xff] %v9
    %s96 = scalar_lea.vmem [#allocation7], 144
    %98 = vst [vmem:[%s96] sm:$0xff] %v9
    %s99 = scalar_lea.vmem [#allocation7], 152
    %101 = vst [vmem:[%s99] sm:$0xff] %v9
    %s102 = scalar_lea.vmem [#allocation7], 160
    %104 = vst [vmem:[%s102] sm:$0xff] %v9
    %s105 = scalar_lea.vmem [#allocation7], 168
    %107 = vst [vmem:[%s105] sm:$0xff] %v9
    %s108 = scalar_lea.vmem [#allocation7], 176
    %110 = vst [vmem:[%s108] sm:$0xff] %v9
    %s111 = scalar_lea.vmem [#allocation7], 184
    %113 = vst [vmem:[%s111] sm:$0xff] %v9
    %s114 = scalar_lea.vmem [#allocation7], 192
    %116 = vst [vmem:[%s114] sm:$0xff] %v9
    %s117 = scalar_lea.vmem [#allocation7], 200
    %119 = vst [vmem:[%s117] sm:$0xff] %v9
    %s120 = scalar_lea.vmem [#allocation7], 208
    %122 = vst [vmem:[%s120] sm:$0xff] %v9
    %s123 = scalar_lea.vmem [#allocation7], 216
    %125 = vst [vmem:[%s123] sm:$0xff] %v9
    %s126 = scalar_lea.vmem [#allocation7], 224
    %128 = vst [vmem:[%s126] sm:$0xff] %v9
    %s129 = scalar_lea.vmem [#allocation7], 232
    %131 = vst [vmem:[%s129] sm:$0xff] %v9
    %s132 = scalar_lea.vmem [#allocation7], 240
    %134 = vst [vmem:[%s132] sm:$0xff] %v9
    %s135 = scalar_lea.vmem [#allocation7], 248
    %137 = vst [vmem:[%s135] sm:$0xff] %v9
    %v138 = vld [vmem:[#allocation7] sm:$0xff]
    %v139 = vld [vmem:[#allocation7 + $0x8] sm:$0xff]
    %v140 = vld [vmem:[#allocation7 + $0x10] sm:$0xff]
    %v141 = vld [vmem:[#allocation7 + $0x18] sm:$0xff]
    %v142 = vld [vmem:[#allocation7 + $0x20] sm:$0xff]
    %v143 = vld [vmem:[#allocation7 + $0x28] sm:$0xff]
    %v144 = vld [vmem:[#allocation7 + $0x30] sm:$0xff]
    %v145 = vld [vmem:[#allocation7 + $0x38] sm:$0xff]
    %v146 = vld [vmem:[#allocation7 + $0x40] sm:$0xff]
    %v147 = vld [vmem:[#allocation7 + $0x48] sm:$0xff]
    %v148 = vld [vmem:[#allocation7 + $0x50] sm:$0xff]
    %v149 = vld [vmem:[#allocation7 + $0x58] sm:$0xff]
    %v150 = vld [vmem:[#allocation7 + $0x60] sm:$0xff]
    %v151 = vld [vmem:[#allocation7 + $0x68] sm:$0xff]
    %v152 = vld [vmem:[#allocation7 + $0x70] sm:$0xff]
    %v153 = vld [vmem:[#allocation7 + $0x78] sm:$0xff]
    %v154 = vld [vmem:[#allocation7 + $0x80] sm:$0xff]
    %v155 = vld [vmem:[#allocation7 + $0x88] sm:$0xff]
    %v156 = vld [vmem:[#allocation7 + $0x90] sm:$0xff]
    %v157 = vld [vmem:[#allocation7 + $0x98] sm:$0xff]
    %v158 = vld [vmem:[#allocation7 + $0xa0] sm:$0xff]
    %v159 = vld [vmem:[#allocation7 + $0xa8] sm:$0xff]
    %v160 = vld [vmem:[#allocation7 + $0xb0] sm:$0xff]
    %v161 = vld [vmem:[#allocation7 + $0xb8] sm:$0xff]
    %v162 = vld [vmem:[#allocation7 + $0xc0] sm:$0xff]
    %v163 = vld [vmem:[#allocation7 + $0xc8] sm:$0xff]
    %v164 = vld [vmem:[#allocation7 + $0xd0] sm:$0xff]
    %v165 = vld [vmem:[#allocation7 + $0xd8] sm:$0xff]
    %v166 = vld [vmem:[#allocation7 + $0xe0] sm:$0xff]
    %v167 = vld [vmem:[#allocation7 + $0xe8] sm:$0xff]
    %v168 = vld [vmem:[#allocation7 + $0xf0] sm:$0xff]
    %v169 = vld [vmem:[#allocation7 + $0xf8] sm:$0xff]
    %v170 = vld [vmem:[%s0] sm:$0xff]
    %v171 = vld [vmem:[%s0 + $0x8] sm:$0xff]
    %v172 = vld [vmem:[%s0 + $0x10] sm:$0xff]
    %v173 = vld [vmem:[%s0 + $0x18] sm:$0xff]
    %v174 = vld [vmem:[%s0 + $0x20] sm:$0xff]
    %v175 = vld [vmem:[%s0 + $0x28] sm:$0xff]
    %v176 = vld [vmem:[%s0 + $0x30] sm:$0xff]
    %v177 = vld [vmem:[%s0 + $0x38] sm:$0xff]
    %v178 = vld [vmem:[%s1] sm:$0x1]
    %v180 = vlaneseq
    %v181 = vshrl.u32 %v180, 7
    %v182 = vsub.s32 0, %v181
    %v183 = vrot.slane %v178, %v182
    %vm185 = vcmask 523264
    %v187 = vsel %vm185, %v138, 0
    %v190 = vsel %vm185, %v139, 0
    %v193 = vsel %vm185, %v140, 0
    %v196 = vsel %vm185, %v141, 0
    %v199 = vsel %vm185, %v142, 0
    %v202 = vsel %vm185, %v143, 0
    %v205 = vsel %vm185, %v144, 0
    %v208 = vsel %vm185, %v145, 0
    %v211 = vsel %vm185, %v146, 0
    %v214 = vsel %vm185, %v147, 0
    %v217 = vsel %vm185, %v148, 0
    %v220 = vsel %vm185, %v149, 0
    %v223 = vsel %vm185, %v150, 0
    %v226 = vsel %vm185, %v151, 0
    %v229 = vsel %vm185, %v152, 0
    %v232 = vsel %vm185, %v153, 0
    %v235 = vsel %vm185, %v154, 0
    %v238 = vsel %vm185, %v155, 0
    %v241 = vsel %vm185, %v156, 0
    %v244 = vsel %vm185, %v157, 0
    %v247 = vsel %vm185, %v158, 0
    %v250 = vsel %vm185, %v159, 0
    %v253 = vsel %vm185, %v160, 0
    %v256 = vsel %vm185, %v161, 0
    %v259 = vsel %vm185, %v162, 0
    %v262 = vsel %vm185, %v163, 0
    %v265 = vsel %vm185, %v164, 0
    %v268 = vsel %vm185, %v165, 0
    %v271 = vsel %vm185, %v166, 0
    %v274 = vsel %vm185, %v167, 0
    %v277 = vsel %vm185, %v168, 0
    %v280 = vsel %vm185, %v169, 0
    %282 = vmatprep.subr.mxu0 0.0
    %283 = vmatpush1.msra.mxu0 %v170
    %284 = vmatprep.subr.mxu0 0.0
    %285 = vmatpush1.msra.mxu0 %v171
    %286 = vmatprep.subr.mxu0 0.0
    %287 = vmatpush1.msra.mxu0 %v172
    %288 = vmatprep.subr.mxu0 0.0
    %289 = vmatpush1.msra.mxu0 %v173
    %290 = vmatprep.subr.mxu0 0.0
    %291 = vmatpush1.msra.mxu0 %v174
    %292 = vmatprep.subr.mxu0 0.0
    %293 = vmatpush1.msra.mxu0 %v175
    %294 = vmatprep.subr.mxu0 0.0
    %295 = vmatpush1.msra.mxu0 %v176
    %296 = vmatprep.subr.mxu0 0.0
    %297 = vmatpush1.msra.mxu0 %v177
    %298 = vmatprep.subr.mxu0 0.0
    %299 = vmatpush1.msra.mxu0 0.0
    %300 = vmatprep.subr.mxu0 0.0
    %301 = vmatpush1.msra.mxu0 0.0
    %302 = vmatprep.subr.mxu0 0.0
    %303 = vmatpush1.msra.mxu0 0.0
    %304 = vmatprep.subr.mxu0 0.0
    %305 = vmatpush1.msra.mxu0 0.0
    %306 = vmatprep.subr.mxu0 0.0
    %307 = vmatpush1.msra.mxu0 0.0
    %308 = vmatprep.subr.mxu0 0.0
    %309 = vmatpush1.msra.mxu0 0.0
    %310 = vmatprep.subr.mxu0 0.0
    %311 = vmatpush1.msra.mxu0 0.0
    %312 = vmatprep.subr.mxu0 0.0
    %313 = vmatpush1.msra.mxu0 0.0
    %314 = vmatprep.subr.mxu0 0.0
    %315 = vmatpush1.msra.mxu0 0.0
    %316 = vmatprep.subr.mxu0 0.0
    %317 = vmatpush1.msra.mxu0 0.0
    %318 = vmatprep.subr.mxu0 0.0
    %319 = vmatpush1.msra.mxu0 0.0
    %320 = vmatprep.subr.mxu0 0.0
    %321 = vmatpush1.msra.mxu0 0.0
    %322 = vmatprep.subr.mxu0 0.0
    %323 = vmatpush1.msra.mxu0 0.0
    %324 = vmatprep.subr.mxu0 0.0
    %325 = vmatpush1.msra.mxu0 0.0
    %326 = vmatprep.subr.mxu0 0.0
    %327 = vmatpush1.msra.mxu0 0.0
    %328 = vmatprep.subr.mxu0 0.0
    %329 = vmatpush1.msra.mxu0 0.0
    %330 = vmatprep.subr.mxu0 0.0
    %331 = vmatpush1.msra.mxu0 0.0
    %332 = vmatprep.subr.mxu0 0.0
    %333 = vmatpush1.msra.mxu0 0.0
    %334 = vmatprep.subr.mxu0 0.0
    %335 = vmatpush1.msra.mxu0 0.0
    %336 = vmatprep.subr.mxu0 0.0
    %337 = vmatpush1.msra.mxu0 0.0
    %338 = vmatprep.subr.mxu0 0.0
    %339 = vmatpush1.msra.mxu0 0.0
    %340 = vmatprep.subr.mxu0 0.0
    %341 = vmatpush1.msra.mxu0 0.0
    %342 = vmatprep.subr.mxu0 0.0
    %343 = vmatpush1.msra.mxu0 0.0
    %344 = vmatprep.subr.mxu0 0.0
    %345 = vmatpush1.msra.mxu0 0.0
    %346 = vmatprep.mubr.f32.mxu0 0.0
    %347 = vmatmul.mubr.f32.gmra.mrb[0].mxu0 %v187
    %v348 = vpop.f32.mrb[0].mxu0
    %v349 = vadd.f32 %v183, %v348
    %v350 = vpop.f32.mrb[0].mxu0
    %351 = vmatprep.mubr.f32.mxu0 0.0
    %352 = vmatmul.mubr.f32.gmra.mrb[0].mxu0 %v190
    %v353 = vpop.f32.mrb[0].mxu0
    %v354 = vadd.f32 %v183, %v353
    %v355 = vpop.f32.mrb[0].mxu0
    %356 = vmatprep.mubr.f32.mxu0 0.0
    %357 = vmatmul.mubr.f32.gmra.mrb[0].mxu0 %v193
    %v358 = vpop.f32.mrb[0].mxu0
    %v359 = vadd.f32 %v183, %v358
    %v360 = vpop.f32.mrb[0].mxu0
    %361 = vmatprep.mubr.f32.mxu0 0.0
    %362 = vmatmul.mubr.f32.gmra.mrb[0].mxu0 %v196
    %v363 = vpop.f32.mrb[0].mxu0
    %v364 = vadd.f32 %v183, %v363
    %v365 = vpop.f32.mrb[0].mxu0
    %366 = vmatprep.mubr.f32.mxu0 0.0
    %367 = vmatmul.mubr.f32.gmra.mrb[0].mxu0 %v199
    %v368 = vpop.f32.mrb[0].mxu0
    %v369 = vadd.f32 %v183, %v368
    %v370 = vpop.f32.mrb[0].mxu0
    %371 = vmatprep.mubr.f32.mxu0 0.0
    %372 = vmatmul.mubr.f32.gmra.mrb[0].mxu0 %v202
    %v373 = vpop.f32.mrb[0].mxu0
    %v374 = vadd.f32 %v183, %v373
    %v375 = vpop.f32.mrb[0].mxu0
    %376 = vmatprep.mubr.f32.mxu0 0.0
    %377 = vmatmul.mubr.f32.gmra.mrb[0].mxu0 %v205
    %v378 = vpop.f32.mrb[0].mxu0
    %v379 = vadd.f32 %v183, %v378
    %v380 = vpop.f32.mrb[0].mxu0
    %381 = vmatprep.mubr.f32.mxu0 0.0
    %382 = vmatmul.mubr.f32.gmra.mrb[0].mxu0 %v208
    %v383 = vpop.f32.mrb[0].mxu0
    %v384 = vadd.f32 %v183, %v383
    %v385 = vpop.f32.mrb[0].mxu0
    %386 = vmatprep.mubr.f32.mxu0 0.0
    %387 = vmatmul.mubr.f32.gmra.mrb[0].mxu0 %v211
    %v388 = vpop.f32.mrb[0].mxu0
    %v389 = vadd.f32 %v183, %v388
    %v390 = vpop.f32.mrb[0].mxu0
    %391 = vmatprep.mubr.f32.mxu0 0.0
    %392 = vmatmul.mubr.f32.gmra.mrb[0].mxu0 %v214
    %v393 = vpop.f32.mrb[0].mxu0
    %v394 = vadd.f32 %v183, %v393
    %v395 = vpop.f32.mrb[0].mxu0
    %396 = vmatprep.mubr.f32.mxu0 0.0
    %397 = vmatmul.mubr.f32.gmra.mrb[0].mxu0 %v217
    %v398 = vpop.f32.mrb[0].mxu0
    %v399 = vadd.f32 %v183, %v398
    %v400 = vpop.f32.mrb[0].mxu0
    %401 = vmatprep.mubr.f32.mxu0 0.0
    %402 = vmatmul.mubr.f32.gmra.mrb[0].mxu0 %v220
    %v403 = vpop.f32.mrb[0].mxu0
    %v404 = vadd.f32 %v183, %v403
    %v405 = vpop.f32.mrb[0].mxu0
    %406 = vmatprep.mubr.f32.mxu0 0.0
    %407 = vmatmul.mubr.f32.gmra.mrb[0].mxu0 %v223
    %v408 = vpop.f32.mrb[0].mxu0
    %v409 = vadd.f32 %v183, %v408
    %v410 = vpop.f32.mrb[0].mxu0
    %411 = vmatprep.mubr.f32.mxu0 0.0
    %412 = vmatmul.mubr.f32.gmra.mrb[0].mxu0 %v226
    %v413 = vpop.f32.mrb[0].mxu0
    %v414 = vadd.f32 %v183, %v413
    %v415 = vpop.f32.mrb[0].mxu0
    %416 = vmatprep.mubr.f32.mxu0 0.0
    %417 = vmatmul.mubr.f32.gmra.mrb[0].mxu0 %v229
    %v418 = vpop.f32.mrb[0].mxu0
    %v419 = vadd.f32 %v183, %v418
    %v420 = vpop.f32.mrb[0].mxu0
    %421 = vmatprep.mubr.f32.mxu0 0.0
    %422 = vmatmul.mubr.f32.gmra.mrb[0].mxu0 %v232
    %v423 = vpop.f32.mrb[0].mxu0
    %v424 = vadd.f32 %v183, %v423
    %v425 = vpop.f32.mrb[0].mxu0
    %426 = vmatprep.mubr.f32.mxu0 0.0
    %427 = vmatmul.mubr.f32.gmra.mrb[0].mxu0 %v235
    %v428 = vpop.f32.mrb[0].mxu0
    %v429 = vadd.f32 %v183, %v428
    %v430 = vpop.f32.mrb[0].mxu0
    %431 = vmatprep.mubr.f32.mxu0 0.0
    %432 = vmatmul.mubr.f32.gmra.mrb[0].mxu0 %v238
    %v433 = vpop.f32.mrb[0].mxu0
    %v434 = vadd.f32 %v183, %v433
    %v435 = vpop.f32.mrb[0].mxu0
    %436 = vmatprep.mubr.f32.mxu0 0.0
    %437 = vmatmul.mubr.f32.gmra.mrb[0].mxu0 %v241
    %v438 = vpop.f32.mrb[0].mxu0
    %v439 = vadd.f32 %v183, %v438
    %v440 = vpop.f32.mrb[0].mxu0
    %441 = vmatprep.mubr.f32.mxu0 0.0
    %442 = vmatmul.mubr.f32.gmra.mrb[0].mxu0 %v244
    %v443 = vpop.f32.mrb[0].mxu0
    %v444 = vadd.f32 %v183, %v443
    %v445 = vpop.f32.mrb[0].mxu0
    %446 = vmatprep.mubr.f32.mxu0 0.0
    %447 = vmatmul.mubr.f32.gmra.mrb[0].mxu0 %v247
    %v448 = vpop.f32.mrb[0].mxu0
    %v449 = vadd.f32 %v183, %v448
    %v450 = vpop.f32.mrb[0].mxu0
    %451 = vmatprep.mubr.f32.mxu0 0.0
    %452 = vmatmul.mubr.f32.gmra.mrb[0].mxu0 %v250
    %v453 = vpop.f32.mrb[0].mxu0
    %v454 = vadd.f32 %v183, %v453
    %v455 = vpop.f32.mrb[0].mxu0
    %456 = vmatprep.mubr.f32.mxu0 0.0
    %457 = vmatmul.mubr.f32.gmra.mrb[0].mxu0 %v253
    %v458 = vpop.f32.mrb[0].mxu0
    %v459 = vadd.f32 %v183, %v458
    %v460 = vpop.f32.mrb[0].mxu0
    %461 = vmatprep.mubr.f32.mxu0 0.0
    %462 = vmatmul.mubr.f32.gmra.mrb[0].mxu0 %v256
    %v463 = vpop.f32.mrb[0].mxu0
    %v464 = vadd.f32 %v183, %v463
    %v465 = vpop.f32.mrb[0].mxu0
    %466 = vmatprep.mubr.f32.mxu0 0.0
    %467 = vmatmul.mubr.f32.gmra.mrb[0].mxu0 %v259
    %v468 = vpop.f32.mrb[0].mxu0
    %v469 = vadd.f32 %v183, %v468
    %v470 = vpop.f32.mrb[0].mxu0
    %471 = vmatprep.mubr.f32.mxu0 0.0
    %472 = vmatmul.mubr.f32.gmra.mrb[0].mxu0 %v262
    %v473 = vpop.f32.mrb[0].mxu0
    %v474 = vadd.f32 %v183, %v473
    %v475 = vpop.f32.mrb[0].mxu0
    %476 = vmatprep.mubr.f32.mxu0 0.0
    %477 = vmatmul.mubr.f32.gmra.mrb[0].mxu0 %v265
    %v478 = vpop.f32.mrb[0].mxu0
    %v479 = vadd.f32 %v183, %v478
    %v480 = vpop.f32.mrb[0].mxu0
    %481 = vmatprep.mubr.f32.mxu0 0.0
    %482 = vmatmul.mubr.f32.gmra.mrb[0].mxu0 %v268
    %v483 = vpop.f32.mrb[0].mxu0
    %v484 = vadd.f32 %v183, %v483
    %v485 = vpop.f32.mrb[0].mxu0
    %486 = vmatprep.mubr.f32.mxu0 0.0
    %487 = vmatmul.mubr.f32.gmra.mrb[0].mxu0 %v271
    %v488 = vpop.f32.mrb[0].mxu0
    %v489 = vadd.f32 %v183, %v488
    %v490 = vpop.f32.mrb[0].mxu0
    %491 = vmatprep.mubr.f32.mxu0 0.0
    %492 = vmatmul.mubr.f32.gmra.mrb[0].mxu0 %v274
    %v493 = vpop.f32.mrb[0].mxu0
    %v494 = vadd.f32 %v183, %v493
    %v495 = vpop.f32.mrb[0].mxu0
    %496 = vmatprep.mubr.f32.mxu0 0.0
    %497 = vmatmul.mubr.f32.gmra.mrb[0].mxu0 %v277
    %v498 = vpop.f32.mrb[0].mxu0
    %v499 = vadd.f32 %v183, %v498
    %v500 = vpop.f32.mrb[0].mxu0
    %501 = vmatprep.mubr.f32.mxu0 0.0
    %502 = vmatmul.mubr.f32.gmra.mrb[0].mxu0 %v280
    %v503 = vpop.f32.mrb[0].mxu0
    %v504 = vadd.f32 %v183, %v503
    %v505 = vpop.f32.mrb[0].mxu0
    %506 = vdwg.mxu0
    %507 = vst [vmem:[%s4] sm:$0xff] %v349
    %508 = vst [vmem:[%s4 + $0x8] sm:$0xff] %v354
    %509 = vst [vmem:[%s4 + $0x10] sm:$0xff] %v359
    %510 = vst [vmem:[%s4 + $0x18] sm:$0xff] %v364
    %511 = vst [vmem:[%s4 + $0x20] sm:$0xff] %v369
    %512 = vst [vmem:[%s4 + $0x28] sm:$0xff] %v374
    %513 = vst [vmem:[%s4 + $0x30] sm:$0xff] %v379
    %514 = vst [vmem:[%s4 + $0x38] sm:$0xff] %v384
    %515 = vst [vmem:[%s4 + $0x40] sm:$0xff] %v389
    %516 = vst [vmem:[%s4 + $0x48] sm:$0xff] %v394
    %517 = vst [vmem:[%s4 + $0x50] sm:$0xff] %v399
    %518 = vst [vmem:[%s4 + $0x58] sm:$0xff] %v404
    %519 = vst [vmem:[%s4 + $0x60] sm:$0xff] %v409
    %520 = vst [vmem:[%s4 + $0x68] sm:$0xff] %v414
    %521 = vst [vmem:[%s4 + $0x70] sm:$0xff] %v419
    %522 = vst [vmem:[%s4 + $0x78] sm:$0xff] %v424
    %523 = vst [vmem:[%s4 + $0x80] sm:$0xff] %v429
    %524 = vst [vmem:[%s4 + $0x88] sm:$0xff] %v434
    %525 = vst [vmem:[%s4 + $0x90] sm:$0xff] %v439
    %526 = vst [vmem:[%s4 + $0x98] sm:$0xff] %v444
    %527 = vst [vmem:[%s4 + $0xa0] sm:$0xff] %v449
    %528 = vst [vmem:[%s4 + $0xa8] sm:$0xff] %v454
    %529 = vst [vmem:[%s4 + $0xb0] sm:$0xff] %v459
    %530 = vst [vmem:[%s4 + $0xb8] sm:$0xff] %v464
    %531 = vst [vmem:[%s4 + $0xc0] sm:$0xff] %v469
    %532 = vst [vmem:[%s4 + $0xc8] sm:$0xff] %v474
    %533 = vst [vmem:[%s4 + $0xd0] sm:$0xff] %v479
    %534 = vst [vmem:[%s4 + $0xd8] sm:$0xff] %v484
    %535 = vst [vmem:[%s4 + $0xe0] sm:$0xff] %v489
    %536 = vst [vmem:[%s4 + $0xe8] sm:$0xff] %v494
    %537 = vst [vmem:[%s4 + $0xf0] sm:$0xff] %v499
    %538 = vst [vmem:[%s4 + $0xf8] sm:$0xff] %v504
    // Predicated region
    $region14: #{patch_embed_forward.2} parent=1 // pred_check
      _
    $region15: #{patch_embed_forward.2} parent=1 // pred_check_branch
      %540 = sbr.rel (0) target = $region17
    $region16: #{patch_embed_forward.2} parent=1 // pred_region
      _
    $region17: #{patch_embed_forward.2} parent=1 // pred_fallthru
      _
    // Predicated region
    $region18: #{patch_embed_forward.2} parent=1 // pred_check
      _
    $region19: #{patch_embed_forward.2} parent=1 // pred_check_branch
      %542 = sbr.rel (0) target = $region21
    $region20: #{patch_embed_forward.2} parent=1 // pred_region
      _
    $region21: #{patch_embed_forward.2} parent=1 // pred_fallthru
      _

</llo_original>
